<compile_context>
chip_gen: v5e
topology: v5e:2x2
jax: 0.10.0
libtpu: 0.0.40
codegen_flags: <defaults>
</compile_context>

<pallas_src>
import functools

import jax
import jax.numpy as jnp
from jax.experimental import pallas as pl
from jax.experimental.pallas import tpu as pltpu


def _kd_partials_kernel(s_logits_ref, t_logits_ref, s_tok_ref, t_tok_ref,
                        kl_out_ref, sq_out_ref, *,
                        inv_t, batch, need_mask, tok_offset):
    """One batch tile: write per-tile KL-sum / squared-error-sum partials."""
    pid = pl.program_id(0)
    tb = s_logits_ref.shape[0]            # batch-tile rows (compile-time)

    # ---- soft cross-entropy term ------------------------------------------
    s = s_logits_ref[...].astype(jnp.float32)
    t = t_logits_ref[...].astype(jnp.float32)
    if inv_t != 1.0:                      # compile-time: no-op when T == 1
        s = s * inv_t
        t = t * inv_t

    valid2 = None
    if need_mask:
        # Last batch tile may run past B; zero the invalid rows before any
        # transcendental touches (possibly stale) padding data.
        row2 = jax.lax.broadcasted_iota(jnp.int32, (tb, 1), 0)
        valid2 = (pid * tb + row2) < batch
        s = jnp.where(valid2, s, 0.0)
        t = jnp.where(valid2, t, 0.0)

    # kl_row = logsumexp(s_shift) - (sum_c t_exp * s_shift) / (sum_c t_exp)
    # (identical to -sum_c softmax(t) * log_softmax(s) up to fp reassociation,
    #  without materializing t_prob or s_logprob full-width temporaries).
    s_shift = s - jnp.max(s, axis=1, keepdims=True)
    z_s = jnp.sum(jnp.exp(s_shift), axis=1, keepdims=True)
    t_exp = jnp.exp(t - jnp.max(t, axis=1, keepdims=True))
    z_t = jnp.sum(t_exp, axis=1, keepdims=True)
    cross = jnp.sum(t_exp * s_shift, axis=1, keepdims=True)
    # Exact reciprocal kept on purpose: approx=True perturbs the softmax
    # normalization beyond the 1e-5 parity check; it is one op per row in a
    # memory-bound kernel (negligible).
    kl_rows = jnp.log(z_s) - cross * pl.reciprocal(z_t)          # (tb, 1)
    if need_mask:
        kl_rows = jnp.where(valid2, kl_rows, 0.0)
    kl_part = jnp.sum(kl_rows)

    # ---- token MSE term (lane-dense (tb, N*D) layout) ----------------------
    s_tok = s_tok_ref[...]
    if tok_offset:
        # Static, lane-aligned slice selecting the last N tokens in-VMEM
        # (avoids the wrapper-side slice's extra HBM round trip).
        s_tok = s_tok[:, tok_offset:]
    diff = s_tok.astype(jnp.float32) - t_tok_ref[...].astype(jnp.float32)
    if need_mask:
        diff = jnp.where(valid2, diff, 0.0)
    sq_part = jnp.sum(diff * diff)

    # Per-tile partials: each tile owns its own (1, 8, 128) output block, so
    # the grid axis can be "parallel" (no shared accumulator, no serial order).
    kl_out_ref[...] = jnp.broadcast_to(kl_part, kl_out_ref.shape)
    sq_out_ref[...] = jnp.broadcast_to(sq_part, sq_out_ref.shape)


def _default_vmem_limit():
    """Generation-aware VMEM budget: ~96 MiB on 128 MiB parts, ~40 MiB on v7x."""
    cap = 128 * 1024 * 1024
    try:
        cap = int(getattr(pltpu.get_tpu_info(), "vmem_capacity_bytes", cap))
    except Exception:
        pass
    if cap <= 0:
        cap = 128 * 1024 * 1024
    if cap <= 64 * 1024 * 1024:           # v7x: 64 MiB VMEM per TensorCore
        return 40 * 1024 * 1024
    return 96 * 1024 * 1024               # v5e / v6e: 128 MiB physical VMEM


def _legalize_batch_tile(tb, b):
    """Second-to-last dim of the logits block must be a multiple of 8 or equal
    the full batch extent."""
    tb = max(1, min(int(tb), int(b)))
    if tb == b or tb % 8 == 0:
        return tb
    if tb > 8:
        return (tb // 8) * 8
    return b if b < 8 else 8


def _choose_batch_tile(b, bytes_per_row, budget_bytes):
    """Largest legal batch tile whose per-row footprint fits the VMEM budget."""
    max_rows = budget_bytes // max(int(bytes_per_row), 1)
    if b <= max_rows:
        return b                           # whole batch in one tile (always legal)
    return max(8, (max_rows // 8) * 8)     # multiple of 8 rows


def kl_token_mse_loss(s_logits, t_logits, s_tokens, t_tokens,
                      alpha=0.5, temperature=1.0, batch_tile=None,
                      vmem_limit_bytes=None):
    """output = (s_logits, s_tokens), target = (t_logits, t_tokens).

    Implements KLTokenMSELoss(kd_type='last', reduction='mean'). For the
    tuple/list token variant of the module, pass the last element (host-side).
    """
    b, c = s_logits.shape
    m_tok, d = s_tokens.shape[1], s_tokens.shape[2]
    n_tgt = t_tokens.shape[1]

    # Only the last n_tgt student tokens are compared. If the element offset is
    # lane-aligned, stream the full flattened row and slice in-kernel (no extra
    # HBM round trip); otherwise fall back to a host-side slice.
    tok_offset = (m_tok - n_tgt) * d
    if tok_offset and (tok_offset % 128 != 0):
        s_tokens = jax.lax.slice_in_dim(s_tokens, m_tok - n_tgt, m_tok, axis=1)
        tok_offset = 0

    # Lane-dense 2-D token layout (free contiguous reshape in HBM).
    s_tok2d = s_tokens.reshape(b, -1)
    t_tok2d = t_tokens.reshape(b, n_tgt * d)
    w_s = s_tok2d.shape[1]
    w_t = n_tgt * d

    if vmem_limit_bytes is None:
        vmem_limit_bytes = _default_vmem_limit()
    vmem_limit_bytes = int(vmem_limit_bytes)

    # Per-row VMEM footprint: double-buffered streamed inputs plus the live
    # in-kernel f32 temporaries (~6 (tb,C) arrays for the softmax math, the f32
    # token upcast and the f32 diff).
    isz = lambda x: jnp.dtype(x.dtype).itemsize
    streamed = 2 * (isz(s_logits) * c + isz(t_logits) * c
                    + isz(s_tok2d) * w_s + isz(t_tok2d) * w_t)
    temporaries = 24 * c + 4 * w_s + 8 * w_t
    bytes_per_row = streamed + temporaries
    budget = int(vmem_limit_bytes * 0.45)   # headroom for compiler temps/outputs

    if batch_tile is None:
        tb = _choose_batch_tile(b, bytes_per_row, budget)
    else:
        tb = int(batch_tile)
    tb = _legalize_batch_tile(tb, b)

    num_tiles = (b + tb - 1) // tb
    need_mask = (b % tb) != 0

    kernel = functools.partial(
        _kd_partials_kernel,
        inv_t=1.0 / float(temperature),
        batch=int(b),
        need_mask=bool(need_mask),
        tok_offset=int(tok_offset),
    )

    grid_spec = pltpu.PrefetchScalarGridSpec(
        num_scalar_prefetch=0,
        grid=(num_tiles,),
        in_specs=[
            pl.BlockSpec((tb, c), lambda i: (i, 0)),
            pl.BlockSpec((tb, c), lambda i: (i, 0)),
            pl.BlockSpec((tb, w_s), lambda i: (i, 0)),
            pl.BlockSpec((tb, w_t), lambda i: (i, 0)),
        ],
        out_specs=(
            pl.BlockSpec((1, 8, 128), lambda i: (i, 0, 0)),
            pl.BlockSpec((1, 8, 128), lambda i: (i, 0, 0)),
        ),
    )

    kl_parts, sq_parts = pl.pallas_call(
        kernel,
        out_shape=(jax.ShapeDtypeStruct((num_tiles, 8, 128), jnp.float32),
                   jax.ShapeDtypeStruct((num_tiles, 8, 128), jnp.float32)),
        grid_spec=grid_spec,
        compiler_params=pltpu.CompilerParams(
            dimension_semantics=("parallel",),   # per-tile outputs: no shared state
            vmem_limit_bytes=vmem_limit_bytes,
        ),
    )(s_logits, t_logits, s_tok2d, t_tok2d)

    # Final combine in the wrapper: tree-summed per-tile partials, then the
    # compile-time-constant 1/B and 1/(B*N*D) scales and the alpha mix.
    kl_sum = jnp.sum(kl_parts[:, 0, 0])
    sq_sum = jnp.sum(sq_parts[:, 0, 0])
    return kl_sum * (1.0 / float(b)) + float(alpha) * (
        sq_sum * (1.0 / float(b * n_tgt * d)))


def _reference(s_logits, t_logits, s_tokens, t_tokens, alpha=0.5, T=1.0):
    s = s_logits / T
    t = t_logits / T
    t_prob = jax.nn.softmax(t, axis=1)
    s_logprob = jax.nn.log_softmax(s, axis=1)
    kl = jnp.mean(-jnp.sum(t_prob * s_logprob, axis=1))
    n = t_tokens.shape[1]
    mse = jnp.mean((s_tokens[:, -n:, :] - t_tokens) ** 2)
    return kl + alpha * mse


if __name__ == "__main__":
    key = jax.random.PRNGKey(0)
    k1, k2, k3, k4, k5, k6, k7, k8 = jax.random.split(key, 8)

    # Case 1: tiny shapes (single tile, grid = 1), temperature = 1,
    # lane-aligned in-kernel "last N tokens" slice (offset = 4*32 = 128).
    B, C = 2, 16
    M, N, D = 12, 8, 32
    s_logits = jax.random.normal(k1, (B, C), dtype=jnp.float32)
    t_logits = jax.random.normal(k2, (B, C), dtype=jnp.float32)
    s_tokens = jax.random.normal(k3, (B, M, D), dtype=jnp.float32)
    t_tokens = jax.random.normal(k4, (B, N, D), dtype=jnp.float32)

    loss = kl_token_mse_loss(s_logits, t_logits, s_tokens, t_tokens,
                             alpha=0.5, temperature=1.0)
    loss = jax.block_until_ready(loss)
    ref = _reference(s_logits, t_logits, s_tokens, t_tokens, alpha=0.5, T=1.0)
    assert jnp.allclose(loss, ref, rtol=1e-5, atol=1e-5), (loss, ref)

    # Case 2: batch not divisible by the tile -> exercises the parallel-gridded,
    # masked per-tile-partial path (grid = 3, last tile partially valid),
    # temperature != 1.
    B2 = 20
    s_logits2 = jax.random.normal(k5, (B2, C), dtype=jnp.float32)
    t_logits2 = jax.random.normal(k6, (B2, C), dtype=jnp.float32)
    s_tokens2 = jax.random.normal(k7, (B2, M, D), dtype=jnp.float32)
    t_tokens2 = jax.random.normal(k8, (B2, N, D), dtype=jnp.float32)

    loss2 = kl_token_mse_loss(s_logits2, t_logits2, s_tokens2, t_tokens2,
                              alpha=0.25, temperature=2.0, batch_tile=8)
    loss2 = jax.block_until_ready(loss2)
    ref2 = _reference(s_logits2, t_logits2, s_tokens2, t_tokens2,
                      alpha=0.25, T=2.0)
    assert jnp.allclose(loss2, ref2, rtol=1e-5, atol=1e-5), (loss2, ref2)

    print("KERNEL_OK")
</pallas_src>

<mosaic_0001>
module attributes {stable_mosaic.version = 11 : i64} {
  func.func @_kd_partials_kernel(%arg0: i32, %arg1: memref<2x16xf32, #tpu.memory_space<vmem>>, %arg2: memref<2x16xf32, #tpu.memory_space<vmem>>, %arg3: memref<2x384xf32, #tpu.memory_space<vmem>>, %arg4: memref<2x256xf32, #tpu.memory_space<vmem>>, %arg5: memref<1x8x128xf32, #tpu.memory_space<vmem>>, %arg6: memref<1x8x128xf32, #tpu.memory_space<vmem>>) attributes {dimension_semantics = [#tpu.dimension_semantics<parallel>], iteration_bounds = array<i64: 1>, scalar_prefetch = 0 : i64, scratch_operands = 0 : i64, tpu.core_type = #tpu.core_type<tc>, window_params = [{transform_indices = @transform_0, window_bounds = array<i64: 2, 16>}, {transform_indices = @transform_1, window_bounds = array<i64: 2, 16>}, {transform_indices = @transform_2, window_bounds = array<i64: 2, 384>}, {transform_indices = @transform_3, window_bounds = array<i64: 2, 256>}, {transform_indices = @transform_4, window_bounds = array<i64: 1, 8, 128>}, {transform_indices = @transform_5, window_bounds = array<i64: 1, 8, 128>}]} {
    %c0 = arith.constant 0 : index
    %c0_0 = arith.constant 0 : index
    %0 = vector.load %arg1[%c0, %c0_0] : memref<2x16xf32, #tpu.memory_space<vmem>>, vector<2x16xf32>
    %c0_1 = arith.constant 0 : index
    %c0_2 = arith.constant 0 : index
    %1 = vector.load %arg2[%c0_1, %c0_2] : memref<2x16xf32, #tpu.memory_space<vmem>>, vector<2x16xf32>
    %cst = arith.constant dense<0xFF800000> : vector<2xf32>
    %2 = vector.multi_reduction <maximumf>, %0, %cst [1] : vector<2x16xf32> to vector<2xf32>
    %3 = vector.shape_cast %2 : vector<2xf32> to vector<2x1xf32>
    %4 = vector.broadcast %3 : vector<2x1xf32> to vector<2x16xf32>
    %5 = arith.subf %0, %4 : vector<2x16xf32>
    %6 = math.exp %5 : vector<2x16xf32>
    %cst_3 = arith.constant dense<0.000000e+00> : vector<2xf32>
    %7 = vector.multi_reduction <add>, %6, %cst_3 [1] : vector<2x16xf32> to vector<2xf32>
    %8 = vector.shape_cast %7 : vector<2xf32> to vector<2x1xf32>
    %cst_4 = arith.constant dense<0xFF800000> : vector<2xf32>
    %9 = vector.multi_reduction <maximumf>, %1, %cst_4 [1] : vector<2x16xf32> to vector<2xf32>
    %10 = vector.shape_cast %9 : vector<2xf32> to vector<2x1xf32>
    %11 = vector.broadcast %10 : vector<2x1xf32> to vector<2x16xf32>
    %12 = arith.subf %1, %11 : vector<2x16xf32>
    %13 = math.exp %12 : vector<2x16xf32>
    %cst_5 = arith.constant dense<0.000000e+00> : vector<2xf32>
    %14 = vector.multi_reduction <add>, %13, %cst_5 [1] : vector<2x16xf32> to vector<2xf32>
    %15 = vector.shape_cast %14 : vector<2xf32> to vector<2x1xf32>
    %16 = arith.mulf %13, %5 : vector<2x16xf32>
    %cst_6 = arith.constant dense<0.000000e+00> : vector<2xf32>
    %17 = vector.multi_reduction <add>, %16, %cst_6 [1] : vector<2x16xf32> to vector<2xf32>
    %18 = vector.shape_cast %17 : vector<2xf32> to vector<2x1xf32>
    %19 = math.log %8 : vector<2x1xf32>
    %20 = tpu.reciprocal %15 : vector<2x1xf32> -> vector<2x1xf32>
    %21 = arith.mulf %18, %20 : vector<2x1xf32>
    %22 = arith.subf %19, %21 : vector<2x1xf32>
    %23 = vector.shape_cast %22 : vector<2x1xf32> to vector<1x2x1xf32>
    %cst_7 = arith.constant dense<0.000000e+00> : vector<1xf32>
    %24 = vector.multi_reduction <add>, %23, %cst_7 [1, 2] : vector<1x2x1xf32> to vector<1xf32>
    %25 = vector.shape_cast %24 : vector<1xf32> to vector<1x1x1xf32>
    %26 = vector.extract %25[0, 0, 0] : f32 from vector<1x1x1xf32>
    %c0_8 = arith.constant 0 : index
    %c0_9 = arith.constant 0 : index
    %27 = vector.load %arg3[%c0_8, %c0_9] : memref<2x384xf32, #tpu.memory_space<vmem>>, vector<2x384xf32>
    %28 = vector.extract_strided_slice %27 {offsets = [0, 128], sizes = [2, 256], strides = [1, 1]} : vector<2x384xf32> to vector<2x256xf32>
    %c0_10 = arith.constant 0 : index
    %c0_11 = arith.constant 0 : index
    %29 = vector.load %arg4[%c0_10, %c0_11] : memref<2x256xf32, #tpu.memory_space<vmem>>, vector<2x256xf32>
    %30 = arith.subf %28, %29 : vector<2x256xf32>
    %31 = arith.mulf %30, %30 : vector<2x256xf32>
    %32 = vector.shape_cast %31 : vector<2x256xf32> to vector<1x2x256xf32>
    %cst_12 = arith.constant dense<0.000000e+00> : vector<1xf32>
    %33 = vector.multi_reduction <add>, %32, %cst_12 [1, 2] : vector<1x2x256xf32> to vector<1xf32>
    %34 = vector.shape_cast %33 : vector<1xf32> to vector<1x1x1xf32>
    %35 = vector.extract %34[0, 0, 0] : f32 from vector<1x1x1xf32>
    %36 = vector.broadcast %26 : f32 to vector<1x8x128xf32>
    %c0_13 = arith.constant 0 : index
    %c0_14 = arith.constant 0 : index
    %c0_15 = arith.constant 0 : index
    %37 = vector.load %arg5[%c0_13, %c0_14, %c0_15] : memref<1x8x128xf32, #tpu.memory_space<vmem>>, vector<1x8x128xf32>
    tpu.vector_store %arg5[%c0_13, %c0_14, %c0_15], %36 {strides = array<i32>} : memref<1x8x128xf32, #tpu.memory_space<vmem>>, vector<1x8x128xf32>,
    %38 = vector.broadcast %35 : f32 to vector<1x8x128xf32>
    %c0_16 = arith.constant 0 : index
    %c0_17 = arith.constant 0 : index
    %c0_18 = arith.constant 0 : index
    %39 = vector.load %arg6[%c0_16, %c0_17, %c0_18] : memref<1x8x128xf32, #tpu.memory_space<vmem>>, vector<1x8x128xf32>
    tpu.vector_store %arg6[%c0_16, %c0_17, %c0_18], %38 {strides = array<i32>} : memref<1x8x128xf32, #tpu.memory_space<vmem>>, vector<1x8x128xf32>,
    return
  }
  func.func @transform_0(%arg0: i32) -> (i32, i32) {
    %c0_i32 = arith.constant 0 : i32
    %c0_i32_0 = arith.constant 0 : i32
    return %arg0, %c0_i32 : i32, i32
  }
  func.func @transform_1(%arg0: i32) -> (i32, i32) {
    %c0_i32 = arith.constant 0 : i32
    %c0_i32_0 = arith.constant 0 : i32
    return %arg0, %c0_i32 : i32, i32
  }
  func.func @transform_2(%arg0: i32) -> (i32, i32) {
    %c0_i32 = arith.constant 0 : i32
    %c0_i32_0 = arith.constant 0 : i32
    return %arg0, %c0_i32 : i32, i32
  }
  func.func @transform_3(%arg0: i32) -> (i32, i32) {
    %c0_i32 = arith.constant 0 : i32
    %c0_i32_0 = arith.constant 0 : i32
    return %arg0, %c0_i32 : i32, i32
  }
  func.func @transform_4(%arg0: i32) -> (i32, i32, i32) {
    %c0_i32 = arith.constant 0 : i32
    %c0_i32_0 = arith.constant 0 : i32
    %c0_i32_1 = arith.constant 0 : i32
    return %arg0, %c0_i32, %c0_i32_0 : i32, i32, i32
  }
  func.func @transform_5(%arg0: i32) -> (i32, i32, i32) {
    %c0_i32 = arith.constant 0 : i32
    %c0_i32_0 = arith.constant 0 : i32
    %c0_i32_1 = arith.constant 0 : i32
    return %arg0, %c0_i32, %c0_i32_0 : i32, i32, i32
  }
}

</mosaic_0001>

<llo_original>
// kernel: tpu_custom_call.1
$region0: #{tpu_custom_call.1}
  #allocation0 [shape = 'u32[]', space=smem, size = 0x4, offset = 0x4, fixed_abs, tag = 'smem constant byte address 0x4 - core index']
  #allocation1 [shape = 'u32[72,128]{1,0:T(1,128)}', space=vmem, size = 0x9000, scoped, tag = 'internal scratch']
  %s0 = inlined_call_operand.hbm [shape: f32[2,16], index: 0, kind: input, shape index: {}]
  %s1 = inlined_call_operand.hbm [shape: f32[2,16], index: 1, kind: input, shape index: {}]
  %s2 = inlined_call_operand.hbm [shape: f32[2,384], index: 2, kind: input, shape index: {}]
  %s3 = inlined_call_operand.hbm [shape: f32[2,256], index: 3, kind: input, shape index: {}]
  %s4 = inlined_call_operand.hbm [shape: f32[1,8,128], index: 4, kind: output, shape index: {0}]
  %s5 = inlined_call_operand.hbm [shape: f32[1,8,128], index: 5, kind: output, shape index: {1}]
  %6 = xla_tuple %s4, %s5
  %s7 = sld [smem:[#allocation0]]
  $region50: #{tpu_custom_call.1} parent=0
    _
  %s9 = ssub.s32 1, %s7
  %s10 = scalar_select 0, %s9, %s7
  $region1: #{tpu_custom_call.1} parent=0
    #allocation2 [shape = 'u8[1024]{0}', space=vmem, size = 0x400, scoped, tag = 'input window, operand 0, single buffered']
    #allocation3 [shape = 's32[1]{0}', space=sflag, size = 0x4, scoped, tag = 'scoped memory for tpu_custom_call.1']
    #allocation4 [shape = 's32[1]{0}', space=sflag, size = 0x4, scoped, tag = 'scoped memory for tpu_custom_call.1']
    #allocation5 [shape = 'u8[1024]{0}', space=vmem, size = 0x400, scoped, tag = 'input window, operand 1, single buffered']
    #allocation6 [shape = 's32[1]{0}', space=sflag, size = 0x4, scoped, tag = 'scoped memory for tpu_custom_call.1']
    #allocation7 [shape = 'u8[3072]{0}', space=vmem, size = 0xc00, scoped, tag = 'input window, operand 2, single buffered']
    #allocation8 [shape = 'u8[2048]{0}', space=vmem, size = 0x800, scoped, tag = 'input window, operand 3, single buffered']
    #allocation9 [shape = 's32[1]{0}', space=sflag, size = 0x4, scoped, tag = 'scoped memory for tpu_custom_call.1']
    #allocation10 [shape = 'u8[4096]{0}', space=vmem, size = 0x1000, scoped, tag = 'output window, operand 0, single buffered']
    #allocation11 [shape = 'u8[4096]{0}', space=vmem, size = 0x1000, scoped, tag = 'output window, operand 1, single buffered']
    #allocation12 [shape = 's32[1]{0}', space=sflag, size = 0x4, scoped, tag = 'scoped memory for tpu_custom_call.1']
    %11 = vsyncpa [#allocation3], 0
    %12 = vsyncpa [#allocation6], 0
    %13 = vsyncpa [#allocation9], 0
    %14 = vsyncpa [#allocation4], 0
    %15 = vsyncpa [#allocation12], 0
    // Predicated region
    $region2: #{tpu_custom_call.1} parent=1 // pred_check
      _
    $region3: #{tpu_custom_call.1} parent=1 // pred_check_branch
      %17 = sbr.rel (0) target = $region5
    $region4: #{tpu_custom_call.1} parent=1 // pred_region
      %19 = vsyncadd [#allocation3], 0
      %s21 = sshll.u32 %s0, 4
      %s22 = int_to_ptr.hbm [resolvable:$true] %s21
      %s23 = sshll.u32 [#allocation2], 4
      %s24 = int_to_ptr.vmem [resolvable:$true] %s23
      %26 = dma.hbm_to_vmem [thread:$0]  %s22, 32, %s24, [#allocation3]
    $region5: #{tpu_custom_call.1} parent=1 // pred_fallthru
      _
    // Predicated region
    $region6: #{tpu_custom_call.1} parent=1 // pred_check
      _
    $region7: #{tpu_custom_call.1} parent=1 // pred_check_branch
      %28 = sbr.rel (0) target = $region9
    $region8: #{tpu_custom_call.1} parent=1 // pred_region
      %30 = vsyncadd [#allocation6], 0
      %s32 = sshll.u32 %s1, 4
      %s33 = int_to_ptr.hbm [resolvable:$true] %s32
      %s34 = sshll.u32 [#allocation5], 4
      %s35 = int_to_ptr.vmem [resolvable:$true] %s34
      %37 = dma.hbm_to_vmem [thread:$0]  %s33, 32, %s35, [#allocation6]
    $region9: #{tpu_custom_call.1} parent=1 // pred_fallthru
      _
    // Predicated region
    $region10: #{tpu_custom_call.1} parent=1 // pred_check
      _
    $region11: #{tpu_custom_call.1} parent=1 // pred_check_branch
      %39 = sbr.rel (0) target = $region13
    $region12: #{tpu_custom_call.1} parent=1 // pred_region
      %41 = vsyncadd [#allocation6], 0
      %s43 = sshll.u32 %s2, 4
      %s44 = int_to_ptr.hbm [resolvable:$true] %s43
      %s45 = sshll.u32 [#allocation7], 4
      %s46 = int_to_ptr.vmem [resolvable:$true] %s45
      %48 = dma.hbm_to_vmem [thread:$0]  %s44, 96, %s46, [#allocation6]
    $region13: #{tpu_custom_call.1} parent=1 // pred_fallthru
      _
    // Predicated region
    $region14: #{tpu_custom_call.1} parent=1 // pred_check
      _
    $region15: #{tpu_custom_call.1} parent=1 // pred_check_branch
      %50 = sbr.rel (0) target = $region17
    $region16: #{tpu_custom_call.1} parent=1 // pred_region
      %52 = vsyncadd [#allocation9], 0
      %s54 = sshll.u32 %s3, 4
      %s55 = int_to_ptr.hbm [resolvable:$true] %s54
      %s56 = sshll.u32 [#allocation8], 4
      %s57 = int_to_ptr.vmem [resolvable:$true] %s56
      %59 = dma.hbm_to_vmem [thread:$0]  %s55, 64, %s57, [#allocation9]
    $region17: #{tpu_custom_call.1} parent=1 // pred_fallthru
      _
    // Predicated region
    $region18: #{tpu_custom_call.1} parent=1 // pred_check
      _
    $region19: #{tpu_custom_call.1} parent=1 // pred_check_branch
      %61 = sbr.rel (0) target = $region21
    $region20: #{tpu_custom_call.1} parent=1 // pred_region
      %63 = dma.done [#allocation3], 32
    $region21: #{tpu_custom_call.1} parent=1 // pred_fallthru
      _
    // Predicated region
    $region22: #{tpu_custom_call.1} parent=1 // pred_check
      _
    $region23: #{tpu_custom_call.1} parent=1 // pred_check_branch
      %65 = sbr.rel (0) target = $region25
    $region24: #{tpu_custom_call.1} parent=1 // pred_region
      %67 = dma.done [#allocation6], 32
    $region25: #{tpu_custom_call.1} parent=1 // pred_fallthru
      _
    // Predicated region
    $region26: #{tpu_custom_call.1} parent=1 // pred_check
      _
    $region27: #{tpu_custom_call.1} parent=1 // pred_check_branch
      %69 = sbr.rel (0) target = $region29
    $region28: #{tpu_custom_call.1} parent=1 // pred_region
      %71 = dma.done [#allocation6], 96
    $region29: #{tpu_custom_call.1} parent=1 // pred_fallthru
      _
    // Predicated region
    $region30: #{tpu_custom_call.1} parent=1 // pred_check
      _
    $region31: #{tpu_custom_call.1} parent=1 // pred_check_branch
      %73 = sbr.rel (0) target = $region33
    $region32: #{tpu_custom_call.1} parent=1 // pred_region
      %75 = dma.done [#allocation9], 64
    $region33: #{tpu_custom_call.1} parent=1 // pred_fallthru
      _
    %v76 = vld [vmem:[#allocation2] sm:$0x3]
    %v77 = vld [vmem:[#allocation5] sm:$0x3]
    %vm78 = vcmask 123904
    %v79 = vsel %vm78, %v76, -inf
    %80 = vmax.xlane.f32.xlu0 %v79
    %v81 = vpop.xlane.xlu0 %80
    %v82 = vsub.f32 %v76, %v81
    %v83 = vmul.f32 %v82, 1.442695
    %v84 = vpow.pop %v83
    %v85 = vsel %vm78, %v84, 0.0
    %86 = vadd.xlane.f32.xlu0 %v85
    %v87 = vpop.xlane.xlu0 %86
    %v88 = vsel %vm78, %v77, -inf
    %89 = vmax.xlane.f32.xlu0 %v88
    %v90 = vpop.xlane.xlu0 %89
    %v91 = vsub.f32 %v77, %v90
    %v92 = vmul.f32 %v91, 1.442695
    %v93 = vpow.pop %v92
    %v94 = vsel %vm78, %v93, 0.0
    %95 = vadd.xlane.f32.xlu0 %v94
    %v96 = vpop.xlane.xlu0 %95
    %v97 = vmul.f32 %v93, %v82
    %v98 = vsel %vm78, %v97, 0.0
    %99 = vadd.xlane.f32.xlu0 %v98
    %v100 = vpop.xlane.xlu0 %99
    %v101 = vlog2.pop %v87
    %v102 = vmul.f32 %v101, 0.6931472
    %v103 = vrcp.pop %v96
    %v104 = vmul.f32 %v96, %v103
    %v105 = vsub.f32 1.0, %v104
    %v106 = vmul.f32 %v103, %v105
    %v107 = vadd.f32 %v103, %v106
    %vm108 = vweird.f32 %v96
    %vm109 = vweird.f32 %v103
    %vm110 = vmor %vm108, %vm109
    %v111 = vsel %vm110, %v103, %v107
    %v112 = vand.u32 2147483647, %v96
    %vm113 = vcmp.eq.f32.partialorder %v112, 8.507059e+37
    %v114 = vand.u32 %v96, 2147483648
    %v115 = vor.u32 1.1754944e-38, %v114
    %v116 = vsel %vm113, %v115, %v111
    %v117 = vmul.f32 %v100, %v116
    %v118 = vsub.f32 %v102, %v117
    %vm119 = vcmask 1024
    %v120 = vsel %vm119, %v118, 0.0
    %121 = vadd.xlane.f32.xlu0 %v120
    %v122 = vpop.xlane.xlu0 %121
    %v123 = vrot.slane %v122, 4
    %v124 = vadd.f32 %v122, %v123
    %v125 = vrot.slane %v124, 2
    %v126 = vadd.f32 %v124, %v125
    %v127 = vrot.slane %v126, 1
    %v128 = vadd.f32 %v126, %v127
    %s129 = vtos %v128
    %v130 = vld [vmem:[#allocation7] sm:$0x3f]
    %v131 = vld [vmem:[#allocation8] sm:$0xf]
    %v133 = vrot.slane %v130, 2
    %v135 = vsub.f32 %v133, %v131
    %v136 = vmul.f32 %v135, %v135
    %138 = vst [vmem:[#allocation1] ss:$4 sm:$0xff] %v136
    %v139 = vld.sshfl [vmem:[#allocation1] sm:$0xff pattern:$0x73625140]
    %v140 = vld.sshfl [vmem:[#allocation1 + $0x8] sm:$0xff pattern:$0x73625140]
    %vm143 = vcmask 1041408
    %v144 = vsel %vm143, %v139, 0.0
    %v145 = vsel %vm143, %v140, 0.0
    %v146 = vadd.f32 %v144, %v145
    %147 = vadd.xlane.f32.xlu0 %v146
    %v148 = vpop.xlane.xlu0 %147
    %v149 = vrot.slane %v148, 4
    %v150 = vadd.f32 %v148, %v149
    %v151 = vrot.slane %v150, 2
    %v152 = vadd.f32 %v150, %v151
    %v153 = vrot.slane %v152, 1
    %v154 = vadd.f32 %v152, %v153
    %s155 = vtos %v154
    %v156 = vstv %s129
    %157 = vst [vmem:[#allocation10] sm:$0xff] %v156
    %v158 = vstv %s155
    %159 = vst [vmem:[#allocation11] sm:$0xff] %v158
    // Predicated region
    $region34: #{tpu_custom_call.1} parent=1 // pred_check
      _
    $region35: #{tpu_custom_call.1} parent=1 // pred_check_branch
      %161 = sbr.rel (0) target = $region37
    $region36: #{tpu_custom_call.1} parent=1 // pred_region
      %163 = vsyncadd [#allocation4], 0
      %s165 = sshll.u32 [#allocation10], 4
      %s166 = int_to_ptr.vmem [resolvable:$true] %s165
      %s167 = sshll.u32 %s4, 4
      %s168 = int_to_ptr.hbm [resolvable:$true] %s167
      %170 = dma.vmem_to_hbm [thread:$0]  %s166, 128, %s168, [#allocation4]
    $region37: #{tpu_custom_call.1} parent=1 // pred_fallthru
      _
    // Predicated region
    $region38: #{tpu_custom_call.1} parent=1 // pred_check
      _
    $region39: #{tpu_custom_call.1} parent=1 // pred_check_branch
      %172 = sbr.rel (0) target = $region41
    $region40: #{tpu_custom_call.1} parent=1 // pred_region
      %174 = vsyncadd [#allocation12], 0
      %s176 = sshll.u32 [#allocation11], 4
      %s177 = int_to_ptr.vmem [resolvable:$true] %s176
      %s178 = sshll.u32 %s5, 4
      %s179 = int_to_ptr.hbm [resolvable:$true] %s178
      %181 = dma.vmem_to_hbm [thread:$0]  %s177, 128, %s179, [#allocation12]
    $region41: #{tpu_custom_call.1} parent=1 // pred_fallthru
      _
    // Predicated region
    $region42: #{tpu_custom_call.1} parent=1 // pred_check
      _
    $region43: #{tpu_custom_call.1} parent=1 // pred_check_branch
      %183 = sbr.rel (0) target = $region45
    $region44: #{tpu_custom_call.1} parent=1 // pred_region
      %185 = dma.done [#allocation4], 128
    $region45: #{tpu_custom_call.1} parent=1 // pred_fallthru
      _
    // Predicated region
    $region46: #{tpu_custom_call.1} parent=1 // pred_check
      _
    $region47: #{tpu_custom_call.1} parent=1 // pred_check_branch
      %187 = sbr.rel (0) target = $region49
    $region48: #{tpu_custom_call.1} parent=1 // pred_region
      %189 = dma.done [#allocation12], 128
    $region49: #{tpu_custom_call.1} parent=1 // pred_fallthru
      _
    %190 = vsyncpa [#allocation3], 1
    %191 = vsyncpa [#allocation6], 1
    %192 = vsyncpa [#allocation9], 1
    %193 = vsyncpa [#allocation4], 1
    %194 = vsyncpa [#allocation12], 1

</llo_original>
